<compile_context>
chip_gen: v7x
topology: tpu7x:2x2x1
jax: 0.10.0
libtpu: 0.0.40
codegen_flags: <defaults>
</compile_context>

<pallas_src>
import functools

import jax
import jax.numpy as jnp
from jax.experimental import pallas as pl
from jax.experimental.pallas import tpu as pltpu

LANE = 128


def _convblock_kernel(a_ref, w_ref, b_ref, o_ref, *, C_half):
    # One MXU GEMM computes BOTH convolutions (weights stacked along rows);
    # accumulate in f32 regardless of operand dtype.
    acc = jnp.dot(w_ref[...], a_ref[...], preferred_element_type=jnp.float32)
    acc = acc + b_ref[...]                                   # (2*C_half, 1) bcast
    # Maxout: split the stacked accumulator at the tile-aligned midpoint.
    o_ref[...] = jnp.maximum(acc[:C_half], acc[C_half:]).astype(o_ref.dtype)


def _convblock_maxout_impl(x, w1, b1, w2, b2, *, max_tile_cols, compute_dtype):
    """ConvBlock(maxout=True, activation=None, batchnorm=False) forward."""
    B, C_in, L = x.shape
    C_out, C_in_w, K = w1.shape
    assert C_in_w == C_in and w2.shape == w1.shape
    L_out = L - K + 1
    assert L_out > 0
    assert max_tile_cols % LANE == 0

    c_itemsize = jnp.dtype(compute_dtype).itemsize
    # Sublane packing: 8 rows/vreg for f32 operands, 16 for bf16.
    row_align = 8 * max(1, 4 // c_itemsize)
    C_pad = ((C_out + row_align - 1) // row_align) * row_align

    # ---- host-side layout prep (fused by XLA under the enclosing jit) ------
    # Stack & pad the two conv weights along C_out; fold K into the
    # contraction: flat column index = k*C_in + c (matches im2col row order).
    pad_rows = ((0, C_pad - C_out), (0, 0), (0, 0))
    w = jnp.concatenate([jnp.pad(w1, pad_rows), jnp.pad(w2, pad_rows)], axis=0)
    wf = jnp.transpose(w, (0, 2, 1)).reshape(2 * C_pad, K * C_in)
    wf = wf.astype(compute_dtype)
    bias = jnp.concatenate(
        [jnp.pad(b1, (0, C_pad - C_out)), jnp.pad(b2, (0, C_pad - C_out))]
    ).reshape(2 * C_pad, 1).astype(jnp.float32)

    # Fold batch into the column (lane) axis: output column j = b*L + l.
    n_cols = B * L
    if n_cols >= max_tile_cols:
        TL = max_tile_cols
    else:
        TL = LANE * pl.cdiv(n_cols, LANE)
    n_tiles = pl.cdiv(n_cols, TL)
    n_out_pad = n_tiles * TL

    x2 = jnp.transpose(x, (1, 0, 2)).reshape(C_in, n_cols)
    x2 = jnp.pad(x2, ((0, 0), (0, n_out_pad + K - 1 - n_cols)))
    # Host-side im2col: row (k*C_in + c), column j = x2[c, j + k].  Cross-batch
    # "contaminated" columns (l >= L_out) and zero padding are cropped below.
    a = jnp.stack([x2[:, k:k + n_out_pad] for k in range(K)], axis=0)
    a = a.reshape(K * C_in, n_out_pad).astype(compute_dtype)

    # ---- explicit VMEM budget (double-buffered per-tile blocks + constants) --
    o_itemsize = jnp.dtype(x.dtype).itemsize
    a_blk = K * C_in * TL * c_itemsize
    o_blk = C_pad * TL * o_itemsize
    w_blk = 2 * C_pad * K * C_in * c_itemsize
    b_blk = 2 * C_pad * 4
    acc_tmp = 2 * C_pad * TL * 4
    vmem_bytes = 2 * (a_blk + o_blk + w_blk + b_blk) + acc_tmp + (4 << 20)
    vmem_bytes = int(min(max(vmem_bytes, 16 << 20), 48 << 20))

    kernel = functools.partial(_convblock_kernel, C_half=C_pad)

    out2 = pl.pallas_call(
        kernel,
        out_shape=jax.ShapeDtypeStruct((C_pad, n_out_pad), x.dtype),
        grid_spec=pltpu.PrefetchScalarGridSpec(
            num_scalar_prefetch=0,
            grid=(n_tiles,),
            in_specs=[
                pl.BlockSpec((K * C_in, TL), lambda j: (0, j)),        # im2col tile
                pl.BlockSpec((2 * C_pad, K * C_in), lambda j: (0, 0)), # fused weights
                pl.BlockSpec((2 * C_pad, 1), lambda j: (0, 0)),        # fused biases
            ],
            out_specs=pl.BlockSpec((C_pad, TL), lambda j: (0, j)),
        ),
        compiler_params=pltpu.CompilerParams(
            dimension_semantics=("parallel",),
            vmem_limit_bytes=vmem_bytes,
        ),
    )(a, wf, bias)

    # ---- host-side un-layout (also under jit) ------------------------------
    out = out2[:C_out, :n_cols].reshape(C_out, B, L)[:, :, :L_out]
    return jnp.transpose(out, (1, 0, 2))


convblock_maxout = jax.jit(
    _convblock_maxout_impl, static_argnames=("max_tile_cols", "compute_dtype"))


def _reference(x, w1, b1, w2, b2):
    """Pure-JAX reference using lax.conv_general_dilated (NCW)."""
    dn = jax.lax.conv_dimension_numbers(x.shape, w1.shape, ("NCH", "OIH", "NCH"))
    a = jax.lax.conv_general_dilated(x, w1, (1,), "VALID", dimension_numbers=dn)
    a = a + b1[None, :, None]
    b = jax.lax.conv_general_dilated(x, w2, (1,), "VALID", dimension_numbers=dn)
    b = b + b2[None, :, None]
    return jnp.maximum(a, b)


if __name__ == "__main__":
    # Small shapes consistent with Conv1d(in_channels=4, out_channels=6,
    # kernel_size=3) on a (batch=2, channels=4, seq=16) input.
    B, C_in, C_out, K, L = 2, 4, 6, 3, 16

    key = jax.random.PRNGKey(0)
    kx, kw1, kb1, kw2, kb2 = jax.random.split(key, 5)

    x = jax.random.normal(kx, (B, C_in, L), dtype=jnp.float32)
    bound = 1.0 / (C_in * K) ** 0.5
    w1 = jax.random.uniform(kw1, (C_out, C_in, K), jnp.float32, -bound, bound)
    b1 = jax.random.uniform(kb1, (C_out,), jnp.float32, -bound, bound)
    w2 = jax.random.uniform(kw2, (C_out, C_in, K), jnp.float32, -bound, bound)
    b2 = jax.random.uniform(kb2, (C_out,), jnp.float32, -bound, bound)

    ref = _reference(x, w1, b1, w2, b2)

    # bf16 MXU operands (default fast path) -- f32 accumulator limits error.
    out_bf16 = convblock_maxout(
        x, w1, b1, w2, b2, max_tile_cols=1024, compute_dtype=jnp.bfloat16)
    out_bf16 = jax.block_until_ready(out_bf16)
    assert out_bf16.shape == (B, C_out, L - K + 1)
    assert jnp.allclose(out_bf16, ref, atol=5e-2, rtol=5e-2), "bf16 mismatch"

    # f32 operand path (exactness check).
    out_f32 = convblock_maxout(
        x, w1, b1, w2, b2, max_tile_cols=1024, compute_dtype=jnp.float32)
    out_f32 = jax.block_until_ready(out_f32)
    assert out_f32.shape == (B, C_out, L - K + 1)
    assert jnp.allclose(out_f32, ref, atol=1e-5, rtol=1e-5), "f32 mismatch"

    print("KERNEL_OK")
</pallas_src>

<mosaic_0001>
module attributes {stable_mosaic.version = 11 : i64} {
  func.func @_convblock_kernel(%arg0: i32, %arg1: memref<12x128xbf16, #tpu.memory_space<vmem>>, %arg2: memref<32x12xbf16, #tpu.memory_space<vmem>>, %arg3: memref<32x1xf32, #tpu.memory_space<vmem>>, %arg4: memref<16x128xf32, #tpu.memory_space<vmem>>) attributes {dimension_semantics = [#tpu.dimension_semantics<parallel>], iteration_bounds = array<i64: 1>, scalar_prefetch = 0 : i64, scratch_operands = 0 : i64, tpu.core_type = #tpu.core_type<tc>, window_params = [{transform_indices = @transform_0, window_bounds = array<i64: 12, 128>}, {pipeline_mode = #tpu.pipeline_mode<synchronous>, transform_indices = @transform_1, window_bounds = array<i64: 32, 12>}, {pipeline_mode = #tpu.pipeline_mode<synchronous>, transform_indices = @transform_2, window_bounds = array<i64: 32, 1>}, {transform_indices = @transform_3, window_bounds = array<i64: 16, 128>}]} {
    %c0 = arith.constant 0 : index
    %c0_0 = arith.constant 0 : index
    %0 = vector.load %arg2[%c0, %c0_0] : memref<32x12xbf16, #tpu.memory_space<vmem>>, vector<32x12xbf16>
    %c0_1 = arith.constant 0 : index
    %c0_2 = arith.constant 0 : index
    %1 = vector.load %arg1[%c0_1, %c0_2] : memref<12x128xbf16, #tpu.memory_space<vmem>>, vector<12x128xbf16>
    %cst = arith.constant dense<0.000000e+00> : vector<32x128xf32>
    %2 = tpu.matmul %0, %1, %cst {dimension_numbers = #tpu.dot_dimension_numbers<[1], [0], [0], [1], [0, 0, 1, 1], [], []>} : vector<32x12xbf16>, vector<12x128xbf16>, vector<32x128xf32> -> vector<32x128xf32>
    %c0_3 = arith.constant 0 : index
    %c0_4 = arith.constant 0 : index
    %3 = vector.load %arg3[%c0_3, %c0_4] : memref<32x1xf32, #tpu.memory_space<vmem>>, vector<32x1xf32>
    %4 = vector.broadcast %3 : vector<32x1xf32> to vector<32x128xf32>
    %5 = arith.addf %2, %4 : vector<32x128xf32>
    %6 = vector.extract_strided_slice %5 {offsets = [0, 0], sizes = [16, 128], strides = [1, 1]} : vector<32x128xf32> to vector<16x128xf32>
    %7 = vector.extract_strided_slice %5 {offsets = [16, 0], sizes = [16, 128], strides = [1, 1]} : vector<32x128xf32> to vector<16x128xf32>
    %8 = arith.maximumf %6, %7 : vector<16x128xf32>
    %c0_5 = arith.constant 0 : index
    %c0_6 = arith.constant 0 : index
    %9 = vector.load %arg4[%c0_5, %c0_6] : memref<16x128xf32, #tpu.memory_space<vmem>>, vector<16x128xf32>
    tpu.vector_store %arg4[%c0_5, %c0_6], %8 {strides = array<i32>} : memref<16x128xf32, #tpu.memory_space<vmem>>, vector<16x128xf32>,
    return
  }
  func.func @transform_0(%arg0: i32) -> (i32, i32) {
    %c0_i32 = arith.constant 0 : i32
    %c0_i32_0 = arith.constant 0 : i32
    return %c0_i32, %arg0 : i32, i32
  }
  func.func @transform_1(%arg0: i32) -> (i32, i32) {
    %c0_i32 = arith.constant 0 : i32
    %c0_i32_0 = arith.constant 0 : i32
    %c0_i32_1 = arith.constant 0 : i32
    return %c0_i32, %c0_i32_0 : i32, i32
  }
  func.func @transform_2(%arg0: i32) -> (i32, i32) {
    %c0_i32 = arith.constant 0 : i32
    %c0_i32_0 = arith.constant 0 : i32
    %c0_i32_1 = arith.constant 0 : i32
    return %c0_i32, %c0_i32_0 : i32, i32
  }
  func.func @transform_3(%arg0: i32) -> (i32, i32) {
    %c0_i32 = arith.constant 0 : i32
    %c0_i32_0 = arith.constant 0 : i32
    return %c0_i32, %arg0 : i32, i32
  }
}

</mosaic_0001>

<llo_original>
// kernel: _convblock_maxout_impl.1
$region0: #{_convblock_maxout_impl.1}
  #allocation0 [shape = 'u32[]', space=smem, size = 0x4, offset = 0x4, fixed_abs, tag = 'smem constant byte address 0x4 - core index']
  #allocation1 [shape = 'u32[144,128]{1,0:T(1,128)}', space=vmem, size = 0x12000, scoped, tag = 'internal scratch']
  %s0 = inlined_call_operand.vmem [shape: bf16[12,128], index: 0, kind: input, shape index: {}]
  %s1 = inlined_call_operand.vmem [shape: bf16[32,12], index: 1, kind: input, shape index: {}]
  %s2 = inlined_call_operand.vmem [shape: f32[32,1], index: 2, kind: input, shape index: {}]
  %s3 = inlined_call_operand.vmem [shape: f32[16,128], index: 3, kind: output, shape index: {}]
  %s4 = sld [smem:[#allocation0]]
  $region22: #{_convblock_maxout_impl.1} parent=0
    _
  %s6 = ssub.s32 1, %s4
  %s7 = scalar_select 0, %s6, %s4
  // Predicated region
  $region2: #{_convblock_maxout_impl.1} parent=0 // pred_check
    _
  $region3: #{_convblock_maxout_impl.1} parent=0 // pred_check_branch
    %9 = sbr.rel (0) target = $region5
  $region4: #{_convblock_maxout_impl.1} parent=0 // pred_region
    _
  $region5: #{_convblock_maxout_impl.1} parent=0 // pred_fallthru
    _
  // Predicated region
  $region6: #{_convblock_maxout_impl.1} parent=0 // pred_check
    _
  $region7: #{_convblock_maxout_impl.1} parent=0 // pred_check_branch
    %11 = sbr.rel (0) target = $region9
  $region8: #{_convblock_maxout_impl.1} parent=0 // pred_region
    _
  $region9: #{_convblock_maxout_impl.1} parent=0 // pred_fallthru
    _
  // Predicated region
  $region10: #{_convblock_maxout_impl.1} parent=0 // pred_check
    _
  $region11: #{_convblock_maxout_impl.1} parent=0 // pred_check_branch
    %13 = sbr.rel (0) target = $region13
  $region12: #{_convblock_maxout_impl.1} parent=0 // pred_region
    _
  $region13: #{_convblock_maxout_impl.1} parent=0 // pred_fallthru
    _
  %v15 = vld [vmem:[%s1] sm:$0xf]
  %v16 = vld [vmem:[%s1 + $0x4] sm:$0xf]
  %v17 = vld [vmem:[%s1 + $0x8] sm:$0xf]
  %v18 = vld [vmem:[%s1 + $0xc] sm:$0xf]
  %v19 = vld [vmem:[%s0] sm:$0xf]
  %v20 = vld [vmem:[%s0 + $0x4] sm:$0x3]
  %v21 = vld [vmem:[%s2] sm:$0xff]
  %v22 = vld [vmem:[%s2 + $0x8] sm:$0xff]
  %v23 = vld [vmem:[%s2 + $0x10] sm:$0xff]
  %v24 = vld [vmem:[%s2 + $0x18] sm:$0xff]
  %26 = vset.pattern.permute.xlu0 0
  %27 = vperm.xlu0 %26, %v21
  %v28 = vpop.permute.xlu0 %27
  %31 = vset.pattern.permute.xlu0 0
  %32 = vperm.xlu0 %31, %v22
  %v33 = vpop.permute.xlu0 %32
  %36 = vset.pattern.permute.xlu0 0
  %37 = vperm.xlu0 %36, %v23
  %v38 = vpop.permute.xlu0 %37
  %41 = vset.pattern.permute.xlu0 0
  %42 = vperm.xlu0 %41, %v24
  %v43 = vpop.permute.xlu0 %42
  %v49 = vunpack.c.l.b16 %v15
  %v50 = vunpack.c.l.b16 %v16
  %v51 = vunpack.c.l.b16 %v17
  %v52 = vunpack.c.l.b16 %v18
  %v53 = vpack.c.b16 %v50, %v49
  %v54 = vpack.c.b16 %v52, %v51
  %v57 = vunpack.c.l.b16 %v19
  %v58 = vunpack.c.l.b16 %v20
  %v59 = vpack.c.b16 %v58, %v57
  %vm60 = vcmask 97280
  %v62 = vsel %vm60, %v53, 0
  %v65 = vsel %vm60, %v54, 0
  %vm67 = vcmask 1045504
  %v69 = vsel %vm67, %v59, 0
  %71 = vmatprep.subr.bf16.mxu0 0
  %72 = vmatpush1.bf16.msra.mxu0 %v69
  %73 = vmatprep.subr.bf16.mxu0 0
  %74 = vmatpush1.bf16.msra.mxu0 0
  %75 = vmatprep.subr.bf16.mxu0 0
  %76 = vmatpush1.bf16.msra.mxu0 0
  %77 = vmatprep.subr.bf16.mxu0 0
  %78 = vmatpush1.bf16.msra.mxu0 0
  %79 = vmatprep.subr.bf16.mxu0 0
  %80 = vmatpush1.bf16.msra.mxu0 0
  %81 = vmatprep.subr.bf16.mxu0 0
  %82 = vmatpush1.bf16.msra.mxu0 0
  %83 = vmatprep.subr.bf16.mxu0 0
  %84 = vmatpush1.bf16.msra.mxu0 0
  %85 = vmatprep.subr.bf16.mxu0 0
  %86 = vmatpush1.bf16.msra.mxu0 0
  %87 = vmatprep.subr.bf16.mxu0 0
  %88 = vmatpush1.bf16.msra.mxu0 0
  %89 = vmatprep.subr.bf16.mxu0 0
  %90 = vmatpush1.bf16.msra.mxu0 0
  %91 = vmatprep.subr.bf16.mxu0 0
  %92 = vmatpush1.bf16.msra.mxu0 0
  %93 = vmatprep.subr.bf16.mxu0 0
  %94 = vmatpush1.bf16.msra.mxu0 0
  %95 = vmatprep.subr.bf16.mxu0 0
  %96 = vmatpush1.bf16.msra.mxu0 0
  %97 = vmatprep.subr.bf16.mxu0 0
  %98 = vmatpush1.bf16.msra.mxu0 0
  %99 = vmatprep.subr.bf16.mxu0 0
  %100 = vmatpush1.bf16.msra.mxu0 0
  %101 = vmatprep.subr.bf16.mxu0 0
  %102 = vmatpush1.bf16.msra.mxu0 0
  %103 = vmatprep.mubr.bf16.mxu0 0
  %104 = vmatmul.mubr.bf16.gmra.mrb[0].mxu0 %v62
  %v105 = vpop.f32.mrb[0].mxu0
  %v106 = vadd.f32 %v28, %v105
  %v107 = vpop.f32.mrb[0].mxu0
  %v108 = vpop.f32.mrb[0].mxu0
  %v109 = vadd.f32 %v33, %v108
  %v110 = vpop.f32.mrb[0].mxu0
  %111 = vmatprep.mubr.bf16.mxu0 0
  %112 = vmatmul.mubr.bf16.gmra.mrb[0].mxu0 %v65
  %v113 = vpop.f32.mrb[0].mxu0
  %v114 = vadd.f32 %v38, %v113
  %v115 = vpop.f32.mrb[0].mxu0
  %v116 = vpop.f32.mrb[0].mxu0
  %v117 = vadd.f32 %v43, %v116
  %v118 = vpop.f32.mrb[0].mxu0
  %119 = vdwg.mxu0
  %v120 = vmax.f32 %v106, %v114
  %v121 = vmax.f32 %v109, %v117
  %122 = vst [vmem:[%s3] sm:$0xff] %v120
  %123 = vst [vmem:[%s3 + $0x8] sm:$0xff] %v121
  // Predicated region
  $region14: #{_convblock_maxout_impl.1} parent=0 // pred_check
    _
  $region15: #{_convblock_maxout_impl.1} parent=0 // pred_check_branch
    %125 = sbr.rel (0) target = $region17
  $region16: #{_convblock_maxout_impl.1} parent=0 // pred_region
    _
  $region17: #{_convblock_maxout_impl.1} parent=0 // pred_fallthru
    _
  // Predicated region
  $region18: #{_convblock_maxout_impl.1} parent=0 // pred_check
    _
  $region19: #{_convblock_maxout_impl.1} parent=0 // pred_check_branch
    %127 = sbr.rel (0) target = $region21
  $region20: #{_convblock_maxout_impl.1} parent=0 // pred_region
    _
  $region21: #{_convblock_maxout_impl.1} parent=0 // pred_fallthru
    _

</llo_original>
